<compile_context>
chip_gen: v7x
topology: tpu7x:2x2x1
jax: 0.10.0
libtpu: 0.0.40
codegen_flags: <defaults>
</compile_context>

<pallas_src>
import functools

import jax
import jax.numpy as jnp
from jax.experimental import pallas as pl
from jax.experimental.pallas import tpu as pltpu

_NEG = -1.0e30  # large finite negative for vocab padding (never -inf: 0*inf=NaN on the MXU)


def _round_up(x, m):
    return ((x + m - 1) // m) * m


def _bigram_kernel(idx_ref, tgt_ref, table_ref, logits_ref, partial_ref):
    idx = idx_ref[...]            # (TN, 1) int32
    tgt = tgt_ref[...]            # (TN, 1) int32
    table = table_ref[...]        # (Vp, Vp) float32 (padded with _NEG)
    tn = idx.shape[0]
    vp = table.shape[1]

    # Single lane-iota reused for both the gather one-hot and the target pick.
    col = jax.lax.broadcasted_iota(jnp.int32, (tn, vp), 1)          # (TN, Vp)

    # Row gather of the table via one-hot matmul (exact in f32, runs on MXU).
    # NOTE: keeping f32 preserves exact `logits = table[idx]` semantics; a
    # bf16 one-hot/table would cut MXU passes on v5e at the cost of exactness.
    onehot_idx = (col == idx).astype(table.dtype)                   # (TN, Vp)
    logits = jnp.dot(onehot_idx, table,
                     preferred_element_type=jnp.float32)            # (TN, Vp)
    logits_ref[...] = logits

    # Cross-entropy pieces (ignore_index = -1).  Padded vocab lanes hold
    # _NEG so they vanish from both the max and the exp-sum.
    m = jnp.max(logits, axis=-1, keepdims=True)                     # (TN, 1)
    lse = jnp.log(jnp.sum(jnp.exp(logits - m), axis=-1, keepdims=True)) + m
    tgt_logit = jnp.sum(jnp.where(col == tgt, logits, 0.0),
                        axis=-1, keepdims=True)                     # (TN, 1)
    valid = (tgt != -1).astype(jnp.float32)                         # (TN, 1)
    total = jnp.sum((lse - tgt_logit) * valid)                      # scalar
    count = jnp.sum(valid)                                          # scalar

    # Per-tile partial sums, packed lane-dense into an (1, 8, 128) block:
    # [0, 0, 0] = sum of masked NLL, [0, 0, 1] = number of valid targets.
    sub = jax.lax.broadcasted_iota(jnp.int32, (1, 8, 128), 1)
    lane = jax.lax.broadcasted_iota(jnp.int32, (1, 8, 128), 2)
    partial_ref[...] = jnp.where(
        (sub == 0) & (lane == 0), total,
        jnp.where((sub == 0) & (lane == 1), count, 0.0))


@functools.partial(jax.jit, static_argnames=("row_tile",))
def bigram_forward(idx, targets, logits_table, *, row_tile=1024):
    """idx, targets: (B, T) int; logits_table: (V, V) float.
    Returns (logits (B, T, V) float32, loss scalar float32)."""
    B, T = idx.shape
    V = logits_table.shape[0]
    N = B * T

    # Lane-pad the vocab axis; also pad the gather (row) axis so the one-hot
    # contraction is a clean 128-multiple.
    Vp = _round_up(V, 128)
    table_p = jnp.full((Vp, Vp), _NEG, dtype=jnp.float32)
    table_p = table_p.at[:V, :V].set(logits_table.astype(jnp.float32))

    # Row tile: keep the per-step VMEM footprint roughly constant as Vp grows,
    # and never larger than the (8-rounded) problem itself.
    row_budget = max(8, (row_tile * 128) // Vp)
    TN = min(_round_up(row_budget, 8), _round_up(N, 8))
    num_tiles = pl.cdiv(N, TN)
    Np = num_tiles * TN

    # Flatten and pad the token axis.  Padded rows: idx=0 (harmless gather),
    # target=-1 (ignored by the loss).
    idx_flat = jnp.zeros((Np, 1), jnp.int32).at[:N, 0].set(
        idx.reshape(N).astype(jnp.int32))
    tgt_flat = jnp.full((Np, 1), -1, jnp.int32).at[:N, 0].set(
        targets.reshape(N).astype(jnp.int32))

    logits_p, partials = pl.pallas_call(
        _bigram_kernel,
        out_shape=(
            jax.ShapeDtypeStruct((Np, Vp), jnp.float32),
            jax.ShapeDtypeStruct((num_tiles, 8, 128), jnp.float32),
        ),
        grid=(num_tiles,),
        in_specs=[
            pl.BlockSpec((TN, 1), lambda i: (i, 0)),      # idx tile
            pl.BlockSpec((TN, 1), lambda i: (i, 0)),      # target tile
            pl.BlockSpec((Vp, Vp), lambda i: (0, 0)),     # table: resident
        ],
        out_specs=(
            pl.BlockSpec((TN, Vp), lambda i: (i, 0)),     # lane-dense logits
            pl.BlockSpec((1, 8, 128), lambda i: (i, 0, 0)),  # partial sums
        ),
        compiler_params=pltpu.CompilerParams(
            dimension_semantics=("parallel",),
            vmem_limit_bytes=32 * 1024 * 1024,
        ),
    )(idx_flat, tgt_flat, table_p)

    logits = logits_p[:N, :V].reshape(B, T, V)
    total = jnp.sum(partials[:, 0, 0])
    count = jnp.sum(partials[:, 0, 1])
    # No clamp: all-ignored batch -> 0/0 = NaN, matching F.cross_entropy.
    loss = total / count
    return logits, loss


if __name__ == "__main__":
    # Small, deterministic example: vocab=32 (makemore-like character set),
    # batch=2, sequence length=8.
    V, B, T = 32, 2, 8
    key = jax.random.PRNGKey(0)
    k_tab, k_idx, k_tgt = jax.random.split(key, 3)

    # nn.Parameter(torch.zeros((n, n))) in the module; use a deterministic
    # non-trivial table so the lookup / loss are exercised meaningfully.
    logits_table = jax.random.normal(k_tab, (V, V), dtype=jnp.float32)
    idx = jax.random.randint(k_idx, (B, T), 0, V, dtype=jnp.int32)
    targets = jax.random.randint(k_tgt, (B, T), 0, V, dtype=jnp.int32)
    # Mark a couple of positions as ignored (ignore_index = -1).
    targets = targets.at[0, 0].set(-1).at[1, 3].set(-1)

    logits, loss = bigram_forward(idx, targets, logits_table)
    jax.block_until_ready((logits, loss))

    # Pure-JAX reference check (silent on success).
    ref_logits = logits_table[idx]                                   # (B, T, V)
    flat_logits = ref_logits.reshape(-1, V)
    flat_tgt = targets.reshape(-1)
    lse = jax.scipy.special.logsumexp(flat_logits, axis=-1)
    picked = flat_logits[jnp.arange(flat_logits.shape[0]),
                         jnp.clip(flat_tgt, 0, V - 1)]
    nll = lse - picked
    valid = (flat_tgt != -1).astype(jnp.float32)
    ref_loss = jnp.sum(nll * valid) / jnp.sum(valid)
    assert jnp.allclose(logits, ref_logits, atol=1e-5, rtol=1e-5)
    assert jnp.allclose(loss, ref_loss, atol=1e-5, rtol=1e-5)

    print("KERNEL_OK")
</pallas_src>

<mosaic_0001>
module attributes {stable_mosaic.version = 11 : i64} {
  func.func @_bigram_kernel(%arg0: i32, %arg1: memref<16x1xi32, #tpu.memory_space<vmem>>, %arg2: memref<16x1xi32, #tpu.memory_space<vmem>>, %arg3: memref<128x128xf32, #tpu.memory_space<vmem>>, %arg4: memref<16x128xf32, #tpu.memory_space<vmem>>, %arg5: memref<1x8x128xf32, #tpu.memory_space<vmem>>) attributes {dimension_semantics = [#tpu.dimension_semantics<parallel>], iteration_bounds = array<i64: 1>, scalar_prefetch = 0 : i64, scratch_operands = 0 : i64, tpu.core_type = #tpu.core_type<tc>, window_params = [{transform_indices = @transform_0, window_bounds = array<i64: 16, 1>}, {transform_indices = @transform_1, window_bounds = array<i64: 16, 1>}, {pipeline_mode = #tpu.pipeline_mode<synchronous>, transform_indices = @transform_2, window_bounds = array<i64: 128, 128>}, {transform_indices = @transform_3, window_bounds = array<i64: 16, 128>}, {transform_indices = @transform_4, window_bounds = array<i64: 1, 8, 128>}]} {
    %c0 = arith.constant 0 : index
    %c0_0 = arith.constant 0 : index
    %0 = vector.load %arg1[%c0, %c0_0] : memref<16x1xi32, #tpu.memory_space<vmem>>, vector<16x1xi32>
    %c0_1 = arith.constant 0 : index
    %c0_2 = arith.constant 0 : index
    %1 = vector.load %arg2[%c0_1, %c0_2] : memref<16x1xi32, #tpu.memory_space<vmem>>, vector<16x1xi32>
    %c0_3 = arith.constant 0 : index
    %c0_4 = arith.constant 0 : index
    %2 = vector.load %arg3[%c0_3, %c0_4] : memref<128x128xf32, #tpu.memory_space<vmem>>, vector<128x128xf32>
    %3 = tpu.iota {dimensions = array<i32: 1>} : vector<16x128xi32>
    %4 = vector.broadcast %0 : vector<16x1xi32> to vector<16x128xi32>
    %5 = arith.cmpi eq, %3, %4 : vector<16x128xi32>
    %6 = arith.extui %5 : vector<16x128xi1> to vector<16x128xi32>
    %7 = arith.sitofp %6 : vector<16x128xi32> to vector<16x128xf32>
    %cst = arith.constant dense<0.000000e+00> : vector<16x128xf32>
    %8 = tpu.matmul %7, %2, %cst {dimension_numbers = #tpu.dot_dimension_numbers<[1], [0], [0], [1], [0, 0, 1, 1], [], []>} : vector<16x128xf32>, vector<128x128xf32>, vector<16x128xf32> -> vector<16x128xf32>
    %c0_5 = arith.constant 0 : index
    %c0_6 = arith.constant 0 : index
    %9 = vector.load %arg4[%c0_5, %c0_6] : memref<16x128xf32, #tpu.memory_space<vmem>>, vector<16x128xf32>
    tpu.vector_store %arg4[%c0_5, %c0_6], %8 {strides = array<i32>} : memref<16x128xf32, #tpu.memory_space<vmem>>, vector<16x128xf32>,
    %cst_7 = arith.constant dense<0xFF800000> : vector<16xf32>
    %10 = vector.multi_reduction <maximumf>, %8, %cst_7 [1] : vector<16x128xf32> to vector<16xf32>
    %11 = vector.shape_cast %10 : vector<16xf32> to vector<16x1xf32>
    %12 = vector.broadcast %11 : vector<16x1xf32> to vector<16x128xf32>
    %13 = arith.subf %8, %12 : vector<16x128xf32>
    %14 = math.exp %13 : vector<16x128xf32>
    %cst_8 = arith.constant dense<0.000000e+00> : vector<16xf32>
    %15 = vector.multi_reduction <add>, %14, %cst_8 [1] : vector<16x128xf32> to vector<16xf32>
    %16 = vector.shape_cast %15 : vector<16xf32> to vector<16x1xf32>
    %17 = math.log %16 : vector<16x1xf32>
    %18 = arith.addf %17, %11 : vector<16x1xf32>
    %19 = vector.broadcast %1 : vector<16x1xi32> to vector<16x128xi32>
    %20 = arith.cmpi eq, %3, %19 : vector<16x128xi32>
    %cst_9 = arith.constant 0.000000e+00 : f32
    %21 = vector.broadcast %cst_9 : f32 to vector<16x128xf32>
    %22 = arith.select %20, %8, %21 : vector<16x128xi1>, vector<16x128xf32>
    %cst_10 = arith.constant dense<0.000000e+00> : vector<16xf32>
    %23 = vector.multi_reduction <add>, %22, %cst_10 [1] : vector<16x128xf32> to vector<16xf32>
    %24 = vector.shape_cast %23 : vector<16xf32> to vector<16x1xf32>
    %c-1_i32 = arith.constant -1 : i32
    %25 = vector.broadcast %c-1_i32 : i32 to vector<16x1xi32>
    %26 = arith.cmpi ne, %1, %25 : vector<16x1xi32>
    %27 = arith.extui %26 : vector<16x1xi1> to vector<16x1xi32>
    %28 = arith.sitofp %27 : vector<16x1xi32> to vector<16x1xf32>
    %29 = arith.subf %18, %24 : vector<16x1xf32>
    %30 = arith.mulf %29, %28 : vector<16x1xf32>
    %31 = vector.shape_cast %30 : vector<16x1xf32> to vector<1x16x1xf32>
    %cst_11 = arith.constant dense<0.000000e+00> : vector<1xf32>
    %32 = vector.multi_reduction <add>, %31, %cst_11 [1, 2] : vector<1x16x1xf32> to vector<1xf32>
    %33 = vector.shape_cast %32 : vector<1xf32> to vector<1x1x1xf32>
    %34 = vector.extract %33[0, 0, 0] : f32 from vector<1x1x1xf32>
    %35 = vector.shape_cast %28 : vector<16x1xf32> to vector<1x16x1xf32>
    %cst_12 = arith.constant dense<0.000000e+00> : vector<1xf32>
    %36 = vector.multi_reduction <add>, %35, %cst_12 [1, 2] : vector<1x16x1xf32> to vector<1xf32>
    %37 = vector.shape_cast %36 : vector<1xf32> to vector<1x1x1xf32>
    %38 = vector.extract %37[0, 0, 0] : f32 from vector<1x1x1xf32>
    %39 = tpu.iota {dimensions = array<i32: 1>} : vector<1x8x128xi32>
    %40 = tpu.iota {dimensions = array<i32: 2>} : vector<1x8x128xi32>
    %c0_i32 = arith.constant 0 : i32
    %41 = vector.broadcast %c0_i32 : i32 to vector<1x8x128xi32>
    %42 = arith.cmpi eq, %39, %41 : vector<1x8x128xi32>
    %c0_i32_13 = arith.constant 0 : i32
    %43 = vector.broadcast %c0_i32_13 : i32 to vector<1x8x128xi32>
    %44 = arith.cmpi eq, %40, %43 : vector<1x8x128xi32>
    %45 = arith.andi %42, %44 : vector<1x8x128xi1>
    %c0_i32_14 = arith.constant 0 : i32
    %46 = vector.broadcast %c0_i32_14 : i32 to vector<1x8x128xi32>
    %47 = arith.cmpi eq, %39, %46 : vector<1x8x128xi32>
    %c1_i32 = arith.constant 1 : i32
    %48 = vector.broadcast %c1_i32 : i32 to vector<1x8x128xi32>
    %49 = arith.cmpi eq, %40, %48 : vector<1x8x128xi32>
    %50 = arith.andi %47, %49 : vector<1x8x128xi1>
    %cst_15 = arith.constant 0.000000e+00 : f32
    %51 = vector.broadcast %38 : f32 to vector<1x8x128xf32>
    %52 = vector.broadcast %cst_15 : f32 to vector<1x8x128xf32>
    %53 = arith.select %50, %51, %52 : vector<1x8x128xi1>, vector<1x8x128xf32>
    %54 = vector.broadcast %34 : f32 to vector<1x8x128xf32>
    %55 = arith.select %45, %54, %53 : vector<1x8x128xi1>, vector<1x8x128xf32>
    %c0_16 = arith.constant 0 : index
    %c0_17 = arith.constant 0 : index
    %c0_18 = arith.constant 0 : index
    %56 = vector.load %arg5[%c0_16, %c0_17, %c0_18] : memref<1x8x128xf32, #tpu.memory_space<vmem>>, vector<1x8x128xf32>
    tpu.vector_store %arg5[%c0_16, %c0_17, %c0_18], %55 {strides = array<i32>} : memref<1x8x128xf32, #tpu.memory_space<vmem>>, vector<1x8x128xf32>,
    return
  }
  func.func @transform_0(%arg0: i32) -> (i32, i32) {
    %c0_i32 = arith.constant 0 : i32
    %c0_i32_0 = arith.constant 0 : i32
    return %arg0, %c0_i32 : i32, i32
  }
  func.func @transform_1(%arg0: i32) -> (i32, i32) {
    %c0_i32 = arith.constant 0 : i32
    %c0_i32_0 = arith.constant 0 : i32
    return %arg0, %c0_i32 : i32, i32
  }
  func.func @transform_2(%arg0: i32) -> (i32, i32) {
    %c0_i32 = arith.constant 0 : i32
    %c0_i32_0 = arith.constant 0 : i32
    %c0_i32_1 = arith.constant 0 : i32
    return %c0_i32, %c0_i32_0 : i32, i32
  }
  func.func @transform_3(%arg0: i32) -> (i32, i32) {
    %c0_i32 = arith.constant 0 : i32
    %c0_i32_0 = arith.constant 0 : i32
    return %arg0, %c0_i32 : i32, i32
  }
  func.func @transform_4(%arg0: i32) -> (i32, i32, i32) {
    %c0_i32 = arith.constant 0 : i32
    %c0_i32_0 = arith.constant 0 : i32
    %c0_i32_1 = arith.constant 0 : i32
    return %arg0, %c0_i32, %c0_i32_0 : i32, i32, i32
  }
}

</mosaic_0001>

<llo_original>
// kernel: bigram_forward.1
$region0: #{bigram_forward.1}
  #allocation0 [shape = 'u32[]', space=smem, size = 0x4, offset = 0x4, fixed_abs, tag = 'smem constant byte address 0x4 - core index']
  #allocation1 [shape = 'u32[144,128]{1,0:T(1,128)}', space=vmem, size = 0x12000, scoped, tag = 'internal scratch']
  %s0 = inlined_call_operand.vmem [shape: s32[16,1], index: 0, kind: input, shape index: {}]
  %s1 = inlined_call_operand.vmem [shape: s32[16,1], index: 1, kind: input, shape index: {}]
  %s2 = inlined_call_operand.vmem [shape: f32[128,128], index: 2, kind: input, shape index: {}]
  %s3 = inlined_call_operand.vmem [shape: f32[16,128], index: 3, kind: output, shape index: {0}]
  %s4 = inlined_call_operand.vmem [shape: f32[1,8,128], index: 4, kind: output, shape index: {1}]
  %5 = xla_tuple %s3, %s4
  %s6 = sld [smem:[#allocation0]]
  $region30: #{bigram_forward.1} parent=0
    _
  %s8 = ssub.s32 1, %s6
  %s9 = scalar_select 0, %s8, %s6
  // Predicated region
  $region2: #{bigram_forward.1} parent=0 // pred_check
    _
  $region3: #{bigram_forward.1} parent=0 // pred_check_branch
    %11 = sbr.rel (0) target = $region5
  $region4: #{bigram_forward.1} parent=0 // pred_region
    _
  $region5: #{bigram_forward.1} parent=0 // pred_fallthru
    _
  // Predicated region
  $region6: #{bigram_forward.1} parent=0 // pred_check
    _
  $region7: #{bigram_forward.1} parent=0 // pred_check_branch
    %13 = sbr.rel (0) target = $region9
  $region8: #{bigram_forward.1} parent=0 // pred_region
    _
  $region9: #{bigram_forward.1} parent=0 // pred_fallthru
    _
  // Predicated region
  $region10: #{bigram_forward.1} parent=0 // pred_check
    _
  $region11: #{bigram_forward.1} parent=0 // pred_check_branch
    %15 = sbr.rel (0) target = $region13
  $region12: #{bigram_forward.1} parent=0 // pred_region
    _
  $region13: #{bigram_forward.1} parent=0 // pred_fallthru
    _
  %v16 = vld [vmem:[%s0] sm:$0xff]
  %v17 = vld [vmem:[%s0 + $0x8] sm:$0xff]
  %v18 = vld [vmem:[%s1] sm:$0xff]
  %v19 = vld [vmem:[%s1 + $0x8] sm:$0xff]
  %v20 = vld [vmem:[%s2] sm:$0xff]
  %v21 = vld [vmem:[%s2 + $0x8] sm:$0xff]
  %v22 = vld [vmem:[%s2 + $0x10] sm:$0xff]
  %v23 = vld [vmem:[%s2 + $0x18] sm:$0xff]
  %v24 = vld [vmem:[%s2 + $0x20] sm:$0xff]
  %v25 = vld [vmem:[%s2 + $0x28] sm:$0xff]
  %v26 = vld [vmem:[%s2 + $0x30] sm:$0xff]
  %v27 = vld [vmem:[%s2 + $0x38] sm:$0xff]
  %v28 = vld [vmem:[%s2 + $0x40] sm:$0xff]
  %v29 = vld [vmem:[%s2 + $0x48] sm:$0xff]
  %v30 = vld [vmem:[%s2 + $0x50] sm:$0xff]
  %v31 = vld [vmem:[%s2 + $0x58] sm:$0xff]
  %v32 = vld [vmem:[%s2 + $0x60] sm:$0xff]
  %v33 = vld [vmem:[%s2 + $0x68] sm:$0xff]
  %v34 = vld [vmem:[%s2 + $0x70] sm:$0xff]
  %v35 = vld [vmem:[%s2 + $0x78] sm:$0xff]
  %v36 = vlaneseq
  %v37 = vand.u32 %v36, 127
  %38 = vset.pattern.permute.xlu0 0
  %39 = vperm.xlu0 %38, %v16
  %v40 = vpop.permute.xlu0 %39
  %41 = vset.pattern.permute.xlu0 0
  %42 = vperm.xlu0 %41, %v17
  %v43 = vpop.permute.xlu0 %42
  %vm44 = vcmp.eq.s32.totalorder %v37, %v40
  %vm45 = vcmp.eq.s32.totalorder %v37, %v43
  %v46 = vsel %vm44, 1, 0
  %v47 = vsel %vm45, 1, 0
  %v48 = vcvt.s32.f32 %v46
  %v49 = vcvt.s32.f32 %v47
  %50 = vmatprep.subr.mxu0 0.0
  %51 = vmatpush1.msra.mxu0 %v20
  %52 = vmatprep.subr.mxu0 0.0
  %53 = vmatpush1.msra.mxu0 %v21
  %54 = vmatprep.subr.mxu0 0.0
  %55 = vmatpush1.msra.mxu0 %v22
  %56 = vmatprep.subr.mxu0 0.0
  %57 = vmatpush1.msra.mxu0 %v23
  %58 = vmatprep.subr.mxu0 0.0
  %59 = vmatpush1.msra.mxu0 %v24
  %60 = vmatprep.subr.mxu0 0.0
  %61 = vmatpush1.msra.mxu0 %v25
  %62 = vmatprep.subr.mxu0 0.0
  %63 = vmatpush1.msra.mxu0 %v26
  %64 = vmatprep.subr.mxu0 0.0
  %65 = vmatpush1.msra.mxu0 %v27
  %66 = vmatprep.subr.mxu0 0.0
  %67 = vmatpush1.msra.mxu0 %v28
  %68 = vmatprep.subr.mxu0 0.0
  %69 = vmatpush1.msra.mxu0 %v29
  %70 = vmatprep.subr.mxu0 0.0
  %71 = vmatpush1.msra.mxu0 %v30
  %72 = vmatprep.subr.mxu0 0.0
  %73 = vmatpush1.msra.mxu0 %v31
  %74 = vmatprep.subr.mxu0 0.0
  %75 = vmatpush1.msra.mxu0 %v32
  %76 = vmatprep.subr.mxu0 0.0
  %77 = vmatpush1.msra.mxu0 %v33
  %78 = vmatprep.subr.mxu0 0.0
  %79 = vmatpush1.msra.mxu0 %v34
  %80 = vmatprep.subr.mxu0 0.0
  %81 = vmatpush1.msra.mxu0 %v35
  %82 = vmatprep.subr.mxu0 0.0
  %83 = vmatpush1.msra.mxu0 0.0
  %84 = vmatprep.subr.mxu0 0.0
  %85 = vmatpush1.msra.mxu0 0.0
  %86 = vmatprep.subr.mxu0 0.0
  %87 = vmatpush1.msra.mxu0 0.0
  %88 = vmatprep.subr.mxu0 0.0
  %89 = vmatpush1.msra.mxu0 0.0
  %90 = vmatprep.subr.mxu0 0.0
  %91 = vmatpush1.msra.mxu0 0.0
  %92 = vmatprep.subr.mxu0 0.0
  %93 = vmatpush1.msra.mxu0 0.0
  %94 = vmatprep.subr.mxu0 0.0
  %95 = vmatpush1.msra.mxu0 0.0
  %96 = vmatprep.subr.mxu0 0.0
  %97 = vmatpush1.msra.mxu0 0.0
  %98 = vmatprep.subr.mxu0 0.0
  %99 = vmatpush1.msra.mxu0 0.0
  %100 = vmatprep.subr.mxu0 0.0
  %101 = vmatpush1.msra.mxu0 0.0
  %102 = vmatprep.subr.mxu0 0.0
  %103 = vmatpush1.msra.mxu0 0.0
  %104 = vmatprep.subr.mxu0 0.0
  %105 = vmatpush1.msra.mxu0 0.0
  %106 = vmatprep.subr.mxu0 0.0
  %107 = vmatpush1.msra.mxu0 0.0
  %108 = vmatprep.subr.mxu0 0.0
  %109 = vmatpush1.msra.mxu0 0.0
  %110 = vmatprep.subr.mxu0 0.0
  %111 = vmatpush1.msra.mxu0 0.0
  %112 = vmatprep.subr.mxu0 0.0
  %113 = vmatpush1.msra.mxu0 0.0
  %114 = vmatprep.mubr.f32.mxu0 0.0
  %115 = vmatmul.mubr.f32.gmra.mrb[0].mxu0 %v48
  %v116 = vpop.f32.mrb[0].mxu0
  %v117 = vadd.f32 0.0, %v116
  %v118 = vpop.f32.mrb[0].mxu0
  %119 = vmatprep.mubr.f32.mxu0 0.0
  %120 = vmatmul.mubr.f32.gmra.mrb[0].mxu0 %v49
  %v121 = vpop.f32.mrb[0].mxu0
  %v122 = vadd.f32 0.0, %v121
  %v123 = vpop.f32.mrb[0].mxu0
  %124 = vdwg.mxu0
  %125 = vst [vmem:[%s3] sm:$0xff] %v117
  %126 = vst [vmem:[%s3 + $0x8] sm:$0xff] %v122
  %127 = vmax.xlane.f32.xlu0 %v117
  %v128 = vpop.xlane.xlu0 %127
  %129 = vmax.xlane.f32.xlu0 %v122
  %v130 = vpop.xlane.xlu0 %129
  %v131 = vsub.f32 %v117, %v128
  %v132 = vsub.f32 %v122, %v130
  %v133 = vmul.f32 %v131, 1.442695
  %v134 = vpow.pop %v133
  %v135 = vmul.f32 %v132, 1.442695
  %v136 = vpow.pop %v135
  %137 = vadd.xlane.f32.xlu0 %v134
  %v138 = vpop.xlane.xlu0 %137
  %139 = vadd.xlane.f32.xlu0 %v136
  %v140 = vpop.xlane.xlu0 %139
  %v141 = vlog2.pop %v138
  %v142 = vmul.f32 %v141, 0.6931472
  %v143 = vlog2.pop %v140
  %v144 = vmul.f32 %v143, 0.6931472
  %v145 = vadd.f32 %v142, %v128
  %v146 = vadd.f32 %v144, %v130
  %147 = vset.pattern.permute.xlu0 0
  %148 = vperm.xlu0 %147, %v18
  %v149 = vpop.permute.xlu0 %148
  %150 = vset.pattern.permute.xlu0 0
  %151 = vperm.xlu0 %150, %v19
  %v152 = vpop.permute.xlu0 %151
  %vm153 = vcmp.eq.s32.totalorder %v37, %v149
  %vm154 = vcmp.eq.s32.totalorder %v37, %v152
  %v155 = vsel %vm153, %v117, 0.0
  %v156 = vsel %vm154, %v122, 0.0
  %157 = vadd.xlane.f32.xlu0 %v155
  %v158 = vpop.xlane.xlu0 %157
  %159 = vadd.xlane.f32.xlu0 %v156
  %v160 = vpop.xlane.xlu0 %159
  %vm161 = vcmp.ne.s32.totalorder %v18, 4294967295
  %vm162 = vcmp.ne.s32.totalorder %v19, 4294967295
  %v163 = vsel %vm161, 1, 0
  %v164 = vsel %vm162, 1, 0
  %v165 = vcvt.s32.f32 %v163
  %v166 = vcvt.s32.f32 %v164
  %v167 = vsub.f32 %v145, %v158
  %v168 = vsub.f32 %v146, %v160
  %v169 = vmul.f32 %v167, %v165
  %v170 = vmul.f32 %v168, %v166
  %vm171 = vcmask 7168
  %v172 = vsel %vm171, %v169, 0.0
  %v173 = vsel %vm171, %v170, 0.0
  %v174 = vadd.f32 %v172, %v173
  %175 = vadd.xlane.f32.xlu0 %v174
  %v176 = vpop.xlane.xlu0 %175
  %v177 = vrot.slane %v176, 4
  %v178 = vadd.f32 %v176, %v177
  %v179 = vrot.slane %v178, 2
  %v180 = vadd.f32 %v178, %v179
  %v181 = vrot.slane %v180, 1
  %v182 = vadd.f32 %v180, %v181
  %s183 = vtos %v182
  %v184 = vsel %vm171, %v165, 0.0
  %v185 = vsel %vm171, %v166, 0.0
  %v186 = vadd.f32 %v184, %v185
  %187 = vadd.xlane.f32.xlu0 %v186
  %v188 = vpop.xlane.xlu0 %187
  %v189 = vrot.slane %v188, 4
  %v190 = vadd.f32 %v188, %v189
  %v191 = vrot.slane %v190, 2
  %v192 = vadd.f32 %v190, %v191
  %v193 = vrot.slane %v192, 1
  %v194 = vadd.f32 %v192, %v193
  %s195 = vtos %v194
  %v196 = vlaneseq
  %v197 = vshrl.u32 %v196, 7
  %vm198 = vcmp.eq.s32.totalorder %v197, 0
  %vm199 = vcmp.eq.s32.totalorder %v37, 0
  %vm200 = vmand %vm198, %vm199
  %vm201 = vcmp.eq.s32.totalorder %v37, 1
  %vm202 = vmand %vm198, %vm201
  %v203 = vstv %s195
  %v204 = vsel %vm202, %v203, 0.0
  %v205 = vstv %s183
  %v206 = vsel %vm200, %v205, %v204
  %207 = vst [vmem:[%s4] sm:$0xff] %v206
  // Predicated region
  $region14: #{bigram_forward.1} parent=0 // pred_check
    _
  $region15: #{bigram_forward.1} parent=0 // pred_check_branch
    %209 = sbr.rel (0) target = $region17
  $region16: #{bigram_forward.1} parent=0 // pred_region
    _
  $region17: #{bigram_forward.1} parent=0 // pred_fallthru
    _
  // Predicated region
  $region18: #{bigram_forward.1} parent=0 // pred_check
    _
  $region19: #{bigram_forward.1} parent=0 // pred_check_branch
    %211 = sbr.rel (0) target = $region21
  $region20: #{bigram_forward.1} parent=0 // pred_region
    _
  $region21: #{bigram_forward.1} parent=0 // pred_fallthru
    _
  // Predicated region
  $region22: #{bigram_forward.1} parent=0 // pred_check
    _
  $region23: #{bigram_forward.1} parent=0 // pred_check_branch
    %213 = sbr.rel (0) target = $region25
  $region24: #{bigram_forward.1} parent=0 // pred_region
    _
  $region25: #{bigram_forward.1} parent=0 // pred_fallthru
    _
  // Predicated region
  $region26: #{bigram_forward.1} parent=0 // pred_check
    _
  $region27: #{bigram_forward.1} parent=0 // pred_check_branch
    %215 = sbr.rel (0) target = $region29
  $region28: #{bigram_forward.1} parent=0 // pred_region
    _
  $region29: #{bigram_forward.1} parent=0 // pred_fallthru
    _

</llo_original>
